<compile_context>
chip_gen: v6e
topology: v6e:2x2x1
jax: 0.10.0
libtpu: 0.0.40
codegen_flags: <defaults>
</compile_context>

<pallas_src>
import math

import jax
import jax.numpy as jnp
from jax.experimental import pallas as pl
from jax.experimental.pallas import tpu as pltpu

SOFT_LOSS_WEIGHT = 0.5
LANE = 128
SUBLANE = 8
_SQRT_EPS = math.sqrt(float(jnp.finfo(jnp.float32).eps))
_HALF_LOG_2PI = 0.5 * math.log(2.0 * math.pi)

# column layout of the lane-dense [TILE_B, 128] output slab
_COL_PRED_P = 3
_COL_PRED_V = 4
_COL_HARD = 5
_COL_SOFT = 6


def _round_up(x, m):
    return (x + m - 1) // m * m


def _lognormal_logprob(x, mu, sigma):
    """log N(log x; mu, sigma) - log x  (torch.distributions.LogNormal.log_prob)."""
    log_x = jnp.log(x)
    return (-log_x - jnp.log(sigma) - _HALF_LOG_2PI
            - jnp.square(log_x - mu) / (2.0 * jnp.square(sigma)))


def _distill_kernel(x_ref, y_ref,
                    wt1_ref, bt1_ref, wt2_ref, bt2_ref,
                    ws1_ref, bs1_ref, ws2_ref, bs2_ref,
                    out_ref):
    x = x_ref[...]      # [TB, D_pad] bf16
    y = y_ref[...]      # [TB, 1]     f32 (ltv3 labels)

    # ---------------- teacher forward (frozen BaseModel, ALL_FEATURES) -------
    h_t = jnp.dot(x, wt1_ref[...], preferred_element_type=jnp.float32) + bt1_ref[...]
    h_t = jnp.maximum(h_t, 0.0)
    logit_t = jnp.dot(h_t.astype(jnp.bfloat16), wt2_ref[...],
                      preferred_element_type=jnp.float32) + bt2_ref[...]   # [TB, 128]

    # ---------------- student forward (BaseModel, ACTIVE_FEATURES) -----------
    # ws1 rows beyond the student feature count are zero, so feeding the full x
    # is exactly equivalent to x[:, :d_student] @ ws1 (no in-kernel lane slice).
    h_s = jnp.dot(x, ws1_ref[...], preferred_element_type=jnp.float32) + bs1_ref[...]
    h_s = jnp.maximum(h_s, 0.0)
    logit_s = jnp.dot(h_s.astype(jnp.bfloat16), ws2_ref[...],
                      preferred_element_type=jnp.float32) + bs2_ref[...]   # [TB, 128]

    p_logit_s = logit_s[:, 0:1]
    mu_s = logit_s[:, 1:2]
    sig_raw_s = logit_s[:, 2:3]
    sigma_s = jnp.maximum(jax.nn.softplus(sig_raw_s), _SQRT_EPS)

    # ---------------- hard loss: _ziln_loss(student logits, labels), per row --
    p_ground = (y > 0.0).astype(jnp.float32)
    # BCEWithLogitsLoss (numerically stable form)
    cls_loss = (jnp.maximum(p_logit_s, 0.0) - p_logit_s * p_ground
                + jnp.log1p(jnp.exp(-jnp.abs(p_logit_s))))
    safe_labels = p_ground * y + (1.0 - p_ground)
    reg_loss = -p_ground * _lognormal_logprob(safe_labels, mu_s, sigma_s)
    hard_row = cls_loss + reg_loss                                         # [TB, 1]

    # ---------------- soft loss: _soft_ziln_loss(teacher, student), per row ---
    p_t = jax.nn.sigmoid(logit_t[:, 0:1])
    mu_t = logit_t[:, 1:2]
    sg_t = logit_t[:, 2:3]                       # raw sigma logit (matches reference)
    soft_labels = p_t * jnp.exp(mu_t + 0.5 * jnp.square(sg_t))
    p_s = jax.nn.sigmoid(p_logit_s)
    soft_cls = (p_t - p_s) * (jnp.log(p_t + 1e-10) - jnp.log(p_s + 1e-10))
    safe_soft = soft_labels + (1.0 - p_t)
    soft_reg = -p_t * _lognormal_logprob(safe_soft, mu_s, sigma_s)
    soft_row = soft_cls + soft_reg                                         # [TB, 1]
    # (for [B,3] logits the reference's mean(dim=-1) then mean(dim=0) reduces to
    #  a plain batch mean of (soft_cls + soft_reg); that mean is done in the wrapper)

    # ---------------- prediction head: _ziln_predict(student logits) ---------
    sigma_pred = jax.nn.softplus(sig_raw_s)
    pred_v = p_s * jnp.exp(mu_s + 0.5 * jnp.square(sigma_pred))            # [TB, 1]

    # ---------------- pack into one lane-dense slab (unmasked stores) --------
    col = jax.lax.broadcasted_iota(jnp.int32, logit_s.shape, 1)
    out = jnp.where(col < 3, logit_s, 0.0)                  # cols 0..2: student logits
    out = jnp.where(col == _COL_PRED_P, p_s, out)
    out = jnp.where(col == _COL_PRED_V, pred_v, out)
    out = jnp.where(col == _COL_HARD, hard_row, out)
    out = jnp.where(col == _COL_SOFT, soft_row, out)
    out_ref[...] = out


def _pad2d(a, rows, cols, dtype=None):
    r, c = a.shape
    a = jnp.pad(a, ((0, rows - r), (0, cols - c)))
    return a.astype(dtype) if dtype is not None else a


def distill_forward(x, labels, teacher_params, student_params, *, tile_b=256):
    """Full DistillModel forward in one tiled Pallas call.

    x:      [B, D_T] f32 dense features (teacher sees all, student the first D_S)
    labels: [B] f32 ltv3 labels
    Returns dict(logit [B,3], loss scalar, prediction_p [B], prediction_v [B]).
    """
    B, D_T = x.shape
    wt1, bt1, wt2, bt2 = teacher_params
    ws1, bs1, ws2, bs2 = student_params

    D_pad = _round_up(D_T, LANE)
    HT_pad = _round_up(wt1.shape[1], LANE)
    HS_pad = _round_up(ws1.shape[1], LANE)
    TILE_B = _round_up(min(tile_b, _round_up(B, SUBLANE)), SUBLANE)
    B_pad = _round_up(B, TILE_B)
    grid = (B_pad // TILE_B,)

    # Host-side zero-padding to native (8,128) tiles; padded rows/cols are exactly
    # zero so results over the real rows/columns are unchanged.
    x_p = _pad2d(x.astype(jnp.float32), B_pad, D_pad, jnp.bfloat16)
    y_p = _pad2d(labels.reshape(B, 1).astype(jnp.float32), B_pad, 1)
    wt1_p = _pad2d(wt1, D_pad, HT_pad, jnp.bfloat16)
    bt1_p = _pad2d(bt1, 1, HT_pad, jnp.float32)
    wt2_p = _pad2d(wt2, HT_pad, LANE, jnp.bfloat16)
    bt2_p = _pad2d(bt2, 1, LANE, jnp.float32)
    ws1_p = _pad2d(ws1, D_pad, HS_pad, jnp.bfloat16)   # zero rows past D_S
    bs1_p = _pad2d(bs1, 1, HS_pad, jnp.float32)
    ws2_p = _pad2d(ws2, HS_pad, LANE, jnp.bfloat16)
    bs2_p = _pad2d(bs2, 1, LANE, jnp.float32)

    def resident(a):   # weights/biases: DMA'd once, resident across the batch grid
        return pl.BlockSpec(a.shape, lambda i: (0, 0))

    in_specs = [
        pl.BlockSpec((TILE_B, D_pad), lambda i: (i, 0)),   # x tile
        pl.BlockSpec((TILE_B, 1), lambda i: (i, 0)),       # labels tile
        resident(wt1_p), resident(bt1_p), resident(wt2_p), resident(bt2_p),
        resident(ws1_p), resident(bs1_p), resident(ws2_p), resident(bs2_p),
    ]
    out_spec = pl.BlockSpec((TILE_B, LANE), lambda i: (i, 0))

    # VMEM budget: double-buffered batch tiles + (conservatively double-counted)
    # resident weights + headroom, capped well inside v7x's 64 MiB physical VMEM.
    w_bytes = (2 * (wt1_p.size + wt2_p.size + ws1_p.size + ws2_p.size)
               + 4 * (bt1_p.size + bt2_p.size + bs1_p.size + bs2_p.size))
    tile_io = TILE_B * (D_pad * 2 + LANE * 4 + LANE * 4)
    vmem_limit = int(min(48 << 20, 2 * tile_io + 2 * w_bytes + (8 << 20)))

    flops = 2 * B_pad * (D_pad * HT_pad + HT_pad * LANE + D_pad * HS_pad + HS_pad * LANE)
    bytes_accessed = int(x_p.size * 2 + y_p.size * 4 + w_bytes + B_pad * LANE * 4)

    out_slab = pl.pallas_call(
        _distill_kernel,
        out_shape=jax.ShapeDtypeStruct((B_pad, LANE), jnp.float32),
        grid_spec=pltpu.PrefetchScalarGridSpec(
            num_scalar_prefetch=0,
            grid=grid,
            in_specs=in_specs,
            out_specs=out_spec),
        compiler_params=pltpu.CompilerParams(
            dimension_semantics=("parallel",),
            vmem_limit_bytes=vmem_limit),
        cost_estimate=pl.CostEstimate(
            flops=flops, transcendentals=16 * B_pad, bytes_accessed=bytes_accessed),
    )(x_p, y_p, wt1_p, bt1_p, wt2_p, bt2_p, ws1_p, bs1_p, ws2_p, bs2_p)

    logit = out_slab[:B, 0:3]
    pred_p = out_slab[:B, _COL_PRED_P]
    pred_v = out_slab[:B, _COL_PRED_V]
    # Exact batch-mean reductions over the real (unpadded) rows:
    loss = (jnp.mean(out_slab[:B, _COL_HARD])
            + SOFT_LOSS_WEIGHT * jnp.mean(out_slab[:B, _COL_SOFT]))

    return {
        "logit": logit,
        "loss": loss,
        "prediction_p": pred_p,
        "prediction_v": pred_v,
    }


def _init_mlp(key, d_in, d_hidden, d_out=3, scale=0.2):
    k1, k2, k3, k4 = jax.random.split(key, 4)
    w1 = scale * jax.random.normal(k1, (d_in, d_hidden), jnp.float32)
    b1 = scale * jax.random.normal(k2, (1, d_hidden), jnp.float32)
    w2 = scale * jax.random.normal(k3, (d_hidden, d_out), jnp.float32)
    b2 = scale * jax.random.normal(k4, (1, d_out), jnp.float32)
    return w1, b1, w2, b2


if __name__ == "__main__":
    key = jax.random.PRNGKey(0)
    k_x, k_y, k_mask, k_t, k_s = jax.random.split(key, 5)

    B, D_T, D_S, H_T, H_S = 8, 32, 16, 64, 32

    x = jax.random.normal(k_x, (B, D_T), jnp.float32)
    # labels: positive LTV values with some exact zeros (zero-inflated target)
    raw = jnp.exp(jax.random.normal(k_y, (B,), jnp.float32))
    mask = jax.random.uniform(k_mask, (B,)) > 0.4
    labels = jnp.where(mask, raw, 0.0)

    teacher_params = _init_mlp(k_t, D_T, H_T)   # frozen teacher (synthetic weights)
    student_params = _init_mlp(k_s, D_S, H_S)

    out = distill_forward(x, labels, teacher_params, student_params)
    out = jax.block_until_ready(out)

    assert out["logit"].shape == (B, 3)
    assert out["loss"].shape == ()
    assert out["prediction_p"].shape == (B,)
    assert out["prediction_v"].shape == (B,)
    assert bool(jnp.all(jnp.isfinite(out["logit"])))
    assert bool(jnp.isfinite(out["loss"]))
    assert bool(jnp.all(jnp.isfinite(out["prediction_p"])))
    assert bool(jnp.all(jnp.isfinite(out["prediction_v"])))
    print("KERNEL_OK")
</pallas_src>

<mosaic_0001>
module attributes {stable_mosaic.version = 11 : i64} {
  func.func @_distill_kernel(%arg0: i32, %arg1: memref<8x128xbf16, #tpu.memory_space<vmem>>, %arg2: memref<8x1xf32, #tpu.memory_space<vmem>>, %arg3: memref<128x128xbf16, #tpu.memory_space<vmem>>, %arg4: memref<1x128xf32, #tpu.memory_space<vmem>>, %arg5: memref<128x128xbf16, #tpu.memory_space<vmem>>, %arg6: memref<1x128xf32, #tpu.memory_space<vmem>>, %arg7: memref<128x128xbf16, #tpu.memory_space<vmem>>, %arg8: memref<1x128xf32, #tpu.memory_space<vmem>>, %arg9: memref<128x128xbf16, #tpu.memory_space<vmem>>, %arg10: memref<1x128xf32, #tpu.memory_space<vmem>>, %arg11: memref<8x128xf32, #tpu.memory_space<vmem>>) attributes {dimension_semantics = [#tpu.dimension_semantics<parallel>], iteration_bounds = array<i64: 1>, scalar_prefetch = 0 : i64, scratch_operands = 0 : i64, tpu.core_type = #tpu.core_type<tc>, window_params = [{transform_indices = @transform_0, window_bounds = array<i64: 8, 128>}, {transform_indices = @transform_1, window_bounds = array<i64: 8, 1>}, {pipeline_mode = #tpu.pipeline_mode<synchronous>, transform_indices = @transform_2, window_bounds = array<i64: 128, 128>}, {pipeline_mode = #tpu.pipeline_mode<synchronous>, transform_indices = @transform_3, window_bounds = array<i64: 1, 128>}, {pipeline_mode = #tpu.pipeline_mode<synchronous>, transform_indices = @transform_4, window_bounds = array<i64: 128, 128>}, {pipeline_mode = #tpu.pipeline_mode<synchronous>, transform_indices = @transform_5, window_bounds = array<i64: 1, 128>}, {pipeline_mode = #tpu.pipeline_mode<synchronous>, transform_indices = @transform_6, window_bounds = array<i64: 128, 128>}, {pipeline_mode = #tpu.pipeline_mode<synchronous>, transform_indices = @transform_7, window_bounds = array<i64: 1, 128>}, {pipeline_mode = #tpu.pipeline_mode<synchronous>, transform_indices = @transform_8, window_bounds = array<i64: 128, 128>}, {pipeline_mode = #tpu.pipeline_mode<synchronous>, transform_indices = @transform_9, window_bounds = array<i64: 1, 128>}, {transform_indices = @transform_10, window_bounds = array<i64: 8, 128>}]} {
    %c0 = arith.constant 0 : index
    %c0_0 = arith.constant 0 : index
    %0 = vector.load %arg1[%c0, %c0_0] : memref<8x128xbf16, #tpu.memory_space<vmem>>, vector<8x128xbf16>
    %c0_1 = arith.constant 0 : index
    %c0_2 = arith.constant 0 : index
    %1 = vector.load %arg2[%c0_1, %c0_2] : memref<8x1xf32, #tpu.memory_space<vmem>>, vector<8x1xf32>
    %c0_3 = arith.constant 0 : index
    %c0_4 = arith.constant 0 : index
    %2 = vector.load %arg3[%c0_3, %c0_4] : memref<128x128xbf16, #tpu.memory_space<vmem>>, vector<128x128xbf16>
    %cst = arith.constant dense<0.000000e+00> : vector<8x128xf32>
    %3 = tpu.matmul %0, %2, %cst {dimension_numbers = #tpu.dot_dimension_numbers<[1], [0], [0], [1], [0, 0, 1, 1], [], []>} : vector<8x128xbf16>, vector<128x128xbf16>, vector<8x128xf32> -> vector<8x128xf32>
    %c0_5 = arith.constant 0 : index
    %c0_6 = arith.constant 0 : index
    %4 = vector.load %arg4[%c0_5, %c0_6] : memref<1x128xf32, #tpu.memory_space<vmem>>, vector<1x128xf32>
    %5 = vector.broadcast %4 : vector<1x128xf32> to vector<8x128xf32>
    %6 = arith.addf %3, %5 : vector<8x128xf32>
    %cst_7 = arith.constant 0.000000e+00 : f32
    %7 = vector.broadcast %cst_7 : f32 to vector<8x128xf32>
    %8 = arith.maximumf %6, %7 : vector<8x128xf32>
    %9 = arith.truncf %8 : vector<8x128xf32> to vector<8x128xbf16>
    %c0_8 = arith.constant 0 : index
    %c0_9 = arith.constant 0 : index
    %10 = vector.load %arg5[%c0_8, %c0_9] : memref<128x128xbf16, #tpu.memory_space<vmem>>, vector<128x128xbf16>
    %cst_10 = arith.constant dense<0.000000e+00> : vector<8x128xf32>
    %11 = tpu.matmul %9, %10, %cst_10 {dimension_numbers = #tpu.dot_dimension_numbers<[1], [0], [0], [1], [0, 0, 1, 1], [], []>} : vector<8x128xbf16>, vector<128x128xbf16>, vector<8x128xf32> -> vector<8x128xf32>
    %c0_11 = arith.constant 0 : index
    %c0_12 = arith.constant 0 : index
    %12 = vector.load %arg6[%c0_11, %c0_12] : memref<1x128xf32, #tpu.memory_space<vmem>>, vector<1x128xf32>
    %13 = vector.broadcast %12 : vector<1x128xf32> to vector<8x128xf32>
    %14 = arith.addf %11, %13 : vector<8x128xf32>
    %c0_13 = arith.constant 0 : index
    %c0_14 = arith.constant 0 : index
    %15 = vector.load %arg7[%c0_13, %c0_14] : memref<128x128xbf16, #tpu.memory_space<vmem>>, vector<128x128xbf16>
    %cst_15 = arith.constant dense<0.000000e+00> : vector<8x128xf32>
    %16 = tpu.matmul %0, %15, %cst_15 {dimension_numbers = #tpu.dot_dimension_numbers<[1], [0], [0], [1], [0, 0, 1, 1], [], []>} : vector<8x128xbf16>, vector<128x128xbf16>, vector<8x128xf32> -> vector<8x128xf32>
    %c0_16 = arith.constant 0 : index
    %c0_17 = arith.constant 0 : index
    %17 = vector.load %arg8[%c0_16, %c0_17] : memref<1x128xf32, #tpu.memory_space<vmem>>, vector<1x128xf32>
    %18 = vector.broadcast %17 : vector<1x128xf32> to vector<8x128xf32>
    %19 = arith.addf %16, %18 : vector<8x128xf32>
    %cst_18 = arith.constant 0.000000e+00 : f32
    %20 = vector.broadcast %cst_18 : f32 to vector<8x128xf32>
    %21 = arith.maximumf %19, %20 : vector<8x128xf32>
    %22 = arith.truncf %21 : vector<8x128xf32> to vector<8x128xbf16>
    %c0_19 = arith.constant 0 : index
    %c0_20 = arith.constant 0 : index
    %23 = vector.load %arg9[%c0_19, %c0_20] : memref<128x128xbf16, #tpu.memory_space<vmem>>, vector<128x128xbf16>
    %cst_21 = arith.constant dense<0.000000e+00> : vector<8x128xf32>
    %24 = tpu.matmul %22, %23, %cst_21 {dimension_numbers = #tpu.dot_dimension_numbers<[1], [0], [0], [1], [0, 0, 1, 1], [], []>} : vector<8x128xbf16>, vector<128x128xbf16>, vector<8x128xf32> -> vector<8x128xf32>
    %c0_22 = arith.constant 0 : index
    %c0_23 = arith.constant 0 : index
    %25 = vector.load %arg10[%c0_22, %c0_23] : memref<1x128xf32, #tpu.memory_space<vmem>>, vector<1x128xf32>
    %26 = vector.broadcast %25 : vector<1x128xf32> to vector<8x128xf32>
    %27 = arith.addf %24, %26 : vector<8x128xf32>
    %28 = vector.extract_strided_slice %27 {offsets = [0, 0], sizes = [8, 1], strides = [1, 1]} : vector<8x128xf32> to vector<8x1xf32>
    %29 = vector.extract_strided_slice %27 {offsets = [0, 1], sizes = [8, 1], strides = [1, 1]} : vector<8x128xf32> to vector<8x1xf32>
    %30 = vector.extract_strided_slice %27 {offsets = [0, 2], sizes = [8, 1], strides = [1, 1]} : vector<8x128xf32> to vector<8x1xf32>
    %cst_24 = arith.constant 0.000000e+00 : f32
    %31 = vector.broadcast %cst_24 : f32 to vector<8x1xf32>
    %32 = arith.maximumf %30, %31 : vector<8x1xf32>
    %33 = vector.broadcast %cst_24 : f32 to vector<8x1xf32>
    %34 = arith.subf %30, %33 : vector<8x1xf32>
    %35 = arith.cmpf one, %34, %34 : vector<8x1xf32>
    %36 = vector.broadcast %cst_24 : f32 to vector<8x1xf32>
    %37 = arith.addf %30, %36 : vector<8x1xf32>
    %38 = math.absf %34 : vector<8x1xf32>
    %cst_25 = arith.constant 0.000000e+00 : f32
    %39 = vector.broadcast %cst_25 : f32 to vector<8x1xf32>
    %40 = arith.subf %39, %38 : vector<8x1xf32>
    %41 = math.exp %40 : vector<8x1xf32>
    %42 = math.log1p %41 : vector<8x1xf32>
    %43 = arith.addf %32, %42 : vector<8x1xf32>
    %44 = arith.select %35, %37, %43 : vector<8x1xi1>, vector<8x1xf32>
    %cst_26 = arith.constant 3.45266977E-4 : f32
    %45 = vector.broadcast %cst_26 : f32 to vector<8x1xf32>
    %46 = arith.maximumf %44, %45 : vector<8x1xf32>
    %cst_27 = arith.constant 0.000000e+00 : f32
    %47 = vector.broadcast %cst_27 : f32 to vector<8x1xf32>
    %48 = arith.cmpf ogt, %1, %47 : vector<8x1xf32>
    %49 = arith.extui %48 : vector<8x1xi1> to vector<8x1xi32>
    %50 = arith.sitofp %49 : vector<8x1xi32> to vector<8x1xf32>
    %cst_28 = arith.constant 0.000000e+00 : f32
    %51 = vector.broadcast %cst_28 : f32 to vector<8x1xf32>
    %52 = arith.maximumf %28, %51 : vector<8x1xf32>
    %53 = arith.mulf %28, %50 : vector<8x1xf32>
    %54 = arith.subf %52, %53 : vector<8x1xf32>
    %55 = math.absf %28 : vector<8x1xf32>
    %cst_29 = arith.constant 0.000000e+00 : f32
    %56 = vector.broadcast %cst_29 : f32 to vector<8x1xf32>
    %57 = arith.subf %56, %55 : vector<8x1xf32>
    %58 = math.exp %57 : vector<8x1xf32>
    %59 = math.log1p %58 : vector<8x1xf32>
    %60 = arith.addf %54, %59 : vector<8x1xf32>
    %61 = arith.mulf %50, %1 : vector<8x1xf32>
    %cst_30 = arith.constant 1.000000e+00 : f32
    %62 = vector.broadcast %cst_30 : f32 to vector<8x1xf32>
    %63 = arith.subf %62, %50 : vector<8x1xf32>
    %64 = arith.addf %61, %63 : vector<8x1xf32>
    %cst_31 = arith.constant 0.000000e+00 : f32
    %65 = vector.broadcast %cst_31 : f32 to vector<8x1xf32>
    %66 = arith.subf %65, %50 : vector<8x1xf32>
    %67 = math.log %64 : vector<8x1xf32>
    %cst_32 = arith.constant 0.000000e+00 : f32
    %68 = vector.broadcast %cst_32 : f32 to vector<8x1xf32>
    %69 = arith.subf %68, %67 : vector<8x1xf32>
    %70 = math.log %46 : vector<8x1xf32>
    %71 = arith.subf %69, %70 : vector<8x1xf32>
    %cst_33 = arith.constant 0.918938517 : f32
    %72 = vector.broadcast %cst_33 : f32 to vector<8x1xf32>
    %73 = arith.subf %71, %72 : vector<8x1xf32>
    %74 = arith.subf %67, %29 : vector<8x1xf32>
    %75 = arith.mulf %74, %74 : vector<8x1xf32>
    %76 = arith.mulf %46, %46 : vector<8x1xf32>
    %cst_34 = arith.constant 2.000000e+00 : f32
    %77 = vector.broadcast %cst_34 : f32 to vector<8x1xf32>
    %78 = arith.mulf %77, %76 : vector<8x1xf32>
    %79 = arith.divf %75, %78 : vector<8x1xf32>
    %80 = arith.subf %73, %79 : vector<8x1xf32>
    %81 = arith.mulf %66, %80 : vector<8x1xf32>
    %82 = arith.addf %60, %81 : vector<8x1xf32>
    %83 = vector.extract_strided_slice %14 {offsets = [0, 0], sizes = [8, 1], strides = [1, 1]} : vector<8x128xf32> to vector<8x1xf32>
    %84 = arith.negf %83 : vector<8x1xf32>
    %85 = math.exp %84 : vector<8x1xf32>
    %cst_35 = arith.constant 1.000000e+00 : f32
    %86 = vector.broadcast %cst_35 : f32 to vector<8x1xf32>
    %87 = arith.addf %86, %85 : vector<8x1xf32>
    %88 = arith.divf %86, %87 : vector<8x1xf32>
    %89 = vector.extract_strided_slice %14 {offsets = [0, 1], sizes = [8, 1], strides = [1, 1]} : vector<8x128xf32> to vector<8x1xf32>
    %90 = vector.extract_strided_slice %14 {offsets = [0, 2], sizes = [8, 1], strides = [1, 1]} : vector<8x128xf32> to vector<8x1xf32>
    %91 = arith.mulf %90, %90 : vector<8x1xf32>
    %cst_36 = arith.constant 5.000000e-01 : f32
    %92 = vector.broadcast %cst_36 : f32 to vector<8x1xf32>
    %93 = arith.mulf %92, %91 : vector<8x1xf32>
    %94 = arith.addf %89, %93 : vector<8x1xf32>
    %95 = math.exp %94 : vector<8x1xf32>
    %96 = arith.mulf %88, %95 : vector<8x1xf32>
    %97 = arith.negf %28 : vector<8x1xf32>
    %98 = math.exp %97 : vector<8x1xf32>
    %cst_37 = arith.constant 1.000000e+00 : f32
    %99 = vector.broadcast %cst_37 : f32 to vector<8x1xf32>
    %100 = arith.addf %99, %98 : vector<8x1xf32>
    %101 = arith.divf %99, %100 : vector<8x1xf32>
    %102 = arith.subf %88, %101 : vector<8x1xf32>
    %cst_38 = arith.constant 1.000000e-10 : f32
    %103 = vector.broadcast %cst_38 : f32 to vector<8x1xf32>
    %104 = arith.addf %88, %103 : vector<8x1xf32>
    %105 = math.log %104 : vector<8x1xf32>
    %cst_39 = arith.constant 1.000000e-10 : f32
    %106 = vector.broadcast %cst_39 : f32 to vector<8x1xf32>
    %107 = arith.addf %101, %106 : vector<8x1xf32>
    %108 = math.log %107 : vector<8x1xf32>
    %109 = arith.subf %105, %108 : vector<8x1xf32>
    %110 = arith.mulf %102, %109 : vector<8x1xf32>
    %cst_40 = arith.constant 1.000000e+00 : f32
    %111 = vector.broadcast %cst_40 : f32 to vector<8x1xf32>
    %112 = arith.subf %111, %88 : vector<8x1xf32>
    %113 = arith.addf %96, %112 : vector<8x1xf32>
    %cst_41 = arith.constant 0.000000e+00 : f32
    %114 = vector.broadcast %cst_41 : f32 to vector<8x1xf32>
    %115 = arith.subf %114, %88 : vector<8x1xf32>
    %116 = math.log %113 : vector<8x1xf32>
    %cst_42 = arith.constant 0.000000e+00 : f32
    %117 = vector.broadcast %cst_42 : f32 to vector<8x1xf32>
    %118 = arith.subf %117, %116 : vector<8x1xf32>
    %119 = math.log %46 : vector<8x1xf32>
    %120 = arith.subf %118, %119 : vector<8x1xf32>
    %cst_43 = arith.constant 0.918938517 : f32
    %121 = vector.broadcast %cst_43 : f32 to vector<8x1xf32>
    %122 = arith.subf %120, %121 : vector<8x1xf32>
    %123 = arith.subf %116, %29 : vector<8x1xf32>
    %124 = arith.mulf %123, %123 : vector<8x1xf32>
    %125 = arith.mulf %46, %46 : vector<8x1xf32>
    %cst_44 = arith.constant 2.000000e+00 : f32
    %126 = vector.broadcast %cst_44 : f32 to vector<8x1xf32>
    %127 = arith.mulf %126, %125 : vector<8x1xf32>
    %128 = arith.divf %124, %127 : vector<8x1xf32>
    %129 = arith.subf %122, %128 : vector<8x1xf32>
    %130 = arith.mulf %115, %129 : vector<8x1xf32>
    %131 = arith.addf %110, %130 : vector<8x1xf32>
    %cst_45 = arith.constant 0.000000e+00 : f32
    %132 = vector.broadcast %cst_45 : f32 to vector<8x1xf32>
    %133 = arith.maximumf %30, %132 : vector<8x1xf32>
    %134 = vector.broadcast %cst_45 : f32 to vector<8x1xf32>
    %135 = arith.subf %30, %134 : vector<8x1xf32>
    %136 = arith.cmpf one, %135, %135 : vector<8x1xf32>
    %137 = vector.broadcast %cst_45 : f32 to vector<8x1xf32>
    %138 = arith.addf %30, %137 : vector<8x1xf32>
    %139 = math.absf %135 : vector<8x1xf32>
    %cst_46 = arith.constant 0.000000e+00 : f32
    %140 = vector.broadcast %cst_46 : f32 to vector<8x1xf32>
    %141 = arith.subf %140, %139 : vector<8x1xf32>
    %142 = math.exp %141 : vector<8x1xf32>
    %143 = math.log1p %142 : vector<8x1xf32>
    %144 = arith.addf %133, %143 : vector<8x1xf32>
    %145 = arith.select %136, %138, %144 : vector<8x1xi1>, vector<8x1xf32>
    %146 = arith.mulf %145, %145 : vector<8x1xf32>
    %cst_47 = arith.constant 5.000000e-01 : f32
    %147 = vector.broadcast %cst_47 : f32 to vector<8x1xf32>
    %148 = arith.mulf %147, %146 : vector<8x1xf32>
    %149 = arith.addf %29, %148 : vector<8x1xf32>
    %150 = math.exp %149 : vector<8x1xf32>
    %151 = arith.mulf %101, %150 : vector<8x1xf32>
    %152 = tpu.iota {dimensions = array<i32: 1>} : vector<8x128xi32>
    %c3_i32 = arith.constant 3 : i32
    %153 = vector.broadcast %c3_i32 : i32 to vector<8x128xi32>
    %154 = arith.cmpi slt, %152, %153 : vector<8x128xi32>
    %cst_48 = arith.constant 0.000000e+00 : f32
    %155 = vector.broadcast %cst_48 : f32 to vector<8x128xf32>
    %156 = arith.select %154, %27, %155 : vector<8x128xi1>, vector<8x128xf32>
    %c3_i32_49 = arith.constant 3 : i32
    %157 = vector.broadcast %c3_i32_49 : i32 to vector<8x128xi32>
    %158 = arith.cmpi eq, %152, %157 : vector<8x128xi32>
    %159 = vector.shape_cast %101 : vector<8x1xf32> to vector<8x1xf32>
    %160 = vector.broadcast %159 : vector<8x1xf32> to vector<8x128xf32>
    %161 = arith.select %158, %160, %156 : vector<8x128xi1>, vector<8x128xf32>
    %c4_i32 = arith.constant 4 : i32
    %162 = vector.broadcast %c4_i32 : i32 to vector<8x128xi32>
    %163 = arith.cmpi eq, %152, %162 : vector<8x128xi32>
    %164 = vector.shape_cast %151 : vector<8x1xf32> to vector<8x1xf32>
    %165 = vector.broadcast %164 : vector<8x1xf32> to vector<8x128xf32>
    %166 = arith.select %163, %165, %161 : vector<8x128xi1>, vector<8x128xf32>
    %c5_i32 = arith.constant 5 : i32
    %167 = vector.broadcast %c5_i32 : i32 to vector<8x128xi32>
    %168 = arith.cmpi eq, %152, %167 : vector<8x128xi32>
    %169 = vector.shape_cast %82 : vector<8x1xf32> to vector<8x1xf32>
    %170 = vector.broadcast %169 : vector<8x1xf32> to vector<8x128xf32>
    %171 = arith.select %168, %170, %166 : vector<8x128xi1>, vector<8x128xf32>
    %c6_i32 = arith.constant 6 : i32
    %172 = vector.broadcast %c6_i32 : i32 to vector<8x128xi32>
    %173 = arith.cmpi eq, %152, %172 : vector<8x128xi32>
    %174 = vector.shape_cast %131 : vector<8x1xf32> to vector<8x1xf32>
    %175 = vector.broadcast %174 : vector<8x1xf32> to vector<8x128xf32>
    %176 = arith.select %173, %175, %171 : vector<8x128xi1>, vector<8x128xf32>
    %c0_50 = arith.constant 0 : index
    %c0_51 = arith.constant 0 : index
    %177 = vector.load %arg11[%c0_50, %c0_51] : memref<8x128xf32, #tpu.memory_space<vmem>>, vector<8x128xf32>
    tpu.vector_store %arg11[%c0_50, %c0_51], %176 {strides = array<i32>} : memref<8x128xf32, #tpu.memory_space<vmem>>, vector<8x128xf32>,
    return
  }
  func.func @transform_0(%arg0: i32) -> (i32, i32) {
    %c0_i32 = arith.constant 0 : i32
    %c0_i32_0 = arith.constant 0 : i32
    return %arg0, %c0_i32 : i32, i32
  }
  func.func @transform_1(%arg0: i32) -> (i32, i32) {
    %c0_i32 = arith.constant 0 : i32
    %c0_i32_0 = arith.constant 0 : i32
    return %arg0, %c0_i32 : i32, i32
  }
  func.func @transform_2(%arg0: i32) -> (i32, i32) {
    %c0_i32 = arith.constant 0 : i32
    %c0_i32_0 = arith.constant 0 : i32
    %c0_i32_1 = arith.constant 0 : i32
    return %c0_i32, %c0_i32_0 : i32, i32
  }
  func.func @transform_3(%arg0: i32) -> (i32, i32) {
    %c0_i32 = arith.constant 0 : i32
    %c0_i32_0 = arith.constant 0 : i32
    %c0_i32_1 = arith.constant 0 : i32
    return %c0_i32, %c0_i32_0 : i32, i32
  }
  func.func @transform_4(%arg0: i32) -> (i32, i32) {
    %c0_i32 = arith.constant 0 : i32
    %c0_i32_0 = arith.constant 0 : i32
    %c0_i32_1 = arith.constant 0 : i32
    return %c0_i32, %c0_i32_0 : i32, i32
  }
  func.func @transform_5(%arg0: i32) -> (i32, i32) {
    %c0_i32 = arith.constant 0 : i32
    %c0_i32_0 = arith.constant 0 : i32
    %c0_i32_1 = arith.constant 0 : i32
    return %c0_i32, %c0_i32_0 : i32, i32
  }
  func.func @transform_6(%arg0: i32) -> (i32, i32) {
    %c0_i32 = arith.constant 0 : i32
    %c0_i32_0 = arith.constant 0 : i32
    %c0_i32_1 = arith.constant 0 : i32
    return %c0_i32, %c0_i32_0 : i32, i32
  }
  func.func @transform_7(%arg0: i32) -> (i32, i32) {
    %c0_i32 = arith.constant 0 : i32
    %c0_i32_0 = arith.constant 0 : i32
    %c0_i32_1 = arith.constant 0 : i32
    return %c0_i32, %c0_i32_0 : i32, i32
  }
  func.func @transform_8(%arg0: i32) -> (i32, i32) {
    %c0_i32 = arith.constant 0 : i32
    %c0_i32_0 = arith.constant 0 : i32
    %c0_i32_1 = arith.constant 0 : i32
    return %c0_i32, %c0_i32_0 : i32, i32
  }
  func.func @transform_9(%arg0: i32) -> (i32, i32) {
    %c0_i32 = arith.constant 0 : i32
    %c0_i32_0 = arith.constant 0 : i32
    %c0_i32_1 = arith.constant 0 : i32
    return %c0_i32, %c0_i32_0 : i32, i32
  }
  func.func @transform_10(%arg0: i32) -> (i32, i32) {
    %c0_i32 = arith.constant 0 : i32
    %c0_i32_0 = arith.constant 0 : i32
    return %arg0, %c0_i32 : i32, i32
  }
}

</mosaic_0001>

<llo_original>
// kernel: tpu_custom_call.1
$region0: #{tpu_custom_call.1}
  #allocation0 [shape = 'u32[]', space=smem, size = 0x4, offset = 0x4, fixed_abs, tag = 'smem constant byte address 0x4 - core index']
  #allocation1 [shape = 'u32[144,128]{1,0:T(1,128)}', space=vmem, size = 0x12000, scoped, tag = 'internal scratch']
  %s0 = inlined_call_operand.vmem [shape: bf16[8,128], index: 0, kind: input, shape index: {}]
  %s1 = inlined_call_operand.vmem [shape: f32[8,1], index: 1, kind: input, shape index: {}]
  %s2 = inlined_call_operand.hbm [shape: bf16[128,128], index: 2, kind: input, shape index: {}]
  %s3 = inlined_call_operand.vmem [shape: f32[1,128], index: 3, kind: input, shape index: {}]
  %s4 = inlined_call_operand.hbm [shape: bf16[128,128], index: 4, kind: input, shape index: {}]
  %s5 = inlined_call_operand.vmem [shape: f32[1,128], index: 5, kind: input, shape index: {}]
  %s6 = inlined_call_operand.hbm [shape: bf16[128,128], index: 6, kind: input, shape index: {}]
  %s7 = inlined_call_operand.vmem [shape: f32[1,128], index: 7, kind: input, shape index: {}]
  %s8 = inlined_call_operand.hbm [shape: bf16[128,128], index: 8, kind: input, shape index: {}]
  %s9 = inlined_call_operand.vmem [shape: f32[1,128], index: 9, kind: input, shape index: {}]
  %s10 = inlined_call_operand.hbm [shape: f32[8,128], index: 10, kind: output, shape index: {}]
  %s11 = sld [smem:[#allocation0]]
  $region66: #{tpu_custom_call.1} parent=0
    _
  %s13 = ssub.s32 1, %s11
  %s14 = scalar_select 0, %s13, %s11
  $region1: #{tpu_custom_call.1} parent=0
    #allocation2 [shape = 'u8[32768]{0}', space=vmem, size = 0x8000, scoped, tag = 'input window, operand 2, single buffered']
    #allocation3 [shape = 's32[1]{0}', space=sflag, size = 0x4, scoped, tag = 'scoped memory for tpu_custom_call.1']
    #allocation4 [shape = 's32[1]{0}', space=sflag, size = 0x4, scoped, tag = 'scoped memory for tpu_custom_call.1']
    #allocation5 [shape = 'u8[32768]{0}', space=vmem, size = 0x8000, scoped, tag = 'input window, operand 4, single buffered']
    #allocation6 [shape = 's32[1]{0}', space=sflag, size = 0x4, scoped, tag = 'scoped memory for tpu_custom_call.1']
    #allocation7 [shape = 'u8[32768]{0}', space=vmem, size = 0x8000, scoped, tag = 'input window, operand 6, single buffered']
    #allocation8 [shape = 'u8[32768]{0}', space=vmem, size = 0x8000, scoped, tag = 'input window, operand 8, single buffered']
    #allocation9 [shape = 's32[1]{0}', space=sflag, size = 0x4, scoped, tag = 'scoped memory for tpu_custom_call.1']
    #allocation10 [shape = 'u8[4096]{0}', space=vmem, size = 0x1000, scoped, tag = 'output window, operand 0, single buffered']
    %15 = vsyncpa [#allocation3], 0
    %16 = vsyncpa [#allocation6], 0
    %17 = vsyncpa [#allocation9], 0
    %18 = vsyncpa [#allocation4], 0
    // Predicated region
    $region2: #{tpu_custom_call.1} parent=1 // pred_check
      _
    $region3: #{tpu_custom_call.1} parent=1 // pred_check_branch
      %20 = sbr.rel (0) target = $region5
    $region4: #{tpu_custom_call.1} parent=1 // pred_region
      _
    $region5: #{tpu_custom_call.1} parent=1 // pred_fallthru
      _
    // Predicated region
    $region6: #{tpu_custom_call.1} parent=1 // pred_check
      _
    $region7: #{tpu_custom_call.1} parent=1 // pred_check_branch
      %22 = sbr.rel (0) target = $region9
    $region8: #{tpu_custom_call.1} parent=1 // pred_region
      _
    $region9: #{tpu_custom_call.1} parent=1 // pred_fallthru
      _
    // Predicated region
    $region10: #{tpu_custom_call.1} parent=1 // pred_check
      _
    $region11: #{tpu_custom_call.1} parent=1 // pred_check_branch
      %24 = sbr.rel (0) target = $region13
    $region12: #{tpu_custom_call.1} parent=1 // pred_region
      %s26 = ssub.s32 1024, 1024
      %27 = vsyncadd [#allocation3], %s26
      %s28 = sshll.u32 [#allocation2], 4
      %s29 = int_to_ptr.vmem [resolvable:$true] %s28
      %34 = dma.hbm_to_vmem [thread:$0]  %s2, 1024, %s29, [#allocation3], 64, 64, 4
    $region13: #{tpu_custom_call.1} parent=1 // pred_fallthru
      _
    // Predicated region
    $region14: #{tpu_custom_call.1} parent=1 // pred_check
      _
    $region15: #{tpu_custom_call.1} parent=1 // pred_check_branch
      %36 = sbr.rel (0) target = $region17
    $region16: #{tpu_custom_call.1} parent=1 // pred_region
      _
    $region17: #{tpu_custom_call.1} parent=1 // pred_fallthru
      _
    // Predicated region
    $region18: #{tpu_custom_call.1} parent=1 // pred_check
      _
    $region19: #{tpu_custom_call.1} parent=1 // pred_check_branch
      %38 = sbr.rel (0) target = $region21
    $region20: #{tpu_custom_call.1} parent=1 // pred_region
      %s40 = ssub.s32 1024, 1024
      %41 = vsyncadd [#allocation6], %s40
      %s42 = sshll.u32 [#allocation5], 4
      %s43 = int_to_ptr.vmem [resolvable:$true] %s42
      %48 = dma.hbm_to_vmem [thread:$0]  %s4, 1024, %s43, [#allocation6], 64, 64, 4
    $region21: #{tpu_custom_call.1} parent=1 // pred_fallthru
      _
    // Predicated region
    $region22: #{tpu_custom_call.1} parent=1 // pred_check
      _
    $region23: #{tpu_custom_call.1} parent=1 // pred_check_branch
      %50 = sbr.rel (0) target = $region25
    $region24: #{tpu_custom_call.1} parent=1 // pred_region
      _
    $region25: #{tpu_custom_call.1} parent=1 // pred_fallthru
      _
    // Predicated region
    $region26: #{tpu_custom_call.1} parent=1 // pred_check
      _
    $region27: #{tpu_custom_call.1} parent=1 // pred_check_branch
      %52 = sbr.rel (0) target = $region29
    $region28: #{tpu_custom_call.1} parent=1 // pred_region
      %s54 = ssub.s32 1024, 1024
      %55 = vsyncadd [#allocation6], %s54
      %s56 = sshll.u32 [#allocation7], 4
      %s57 = int_to_ptr.vmem [resolvable:$true] %s56
      %62 = dma.hbm_to_vmem [thread:$0]  %s6, 1024, %s57, [#allocation6], 64, 64, 4
    $region29: #{tpu_custom_call.1} parent=1 // pred_fallthru
      _
    // Predicated region
    $region30: #{tpu_custom_call.1} parent=1 // pred_check
      _
    $region31: #{tpu_custom_call.1} parent=1 // pred_check_branch
      %64 = sbr.rel (0) target = $region33
    $region32: #{tpu_custom_call.1} parent=1 // pred_region
      _
    $region33: #{tpu_custom_call.1} parent=1 // pred_fallthru
      _
    // Predicated region
    $region34: #{tpu_custom_call.1} parent=1 // pred_check
      _
    $region35: #{tpu_custom_call.1} parent=1 // pred_check_branch
      %66 = sbr.rel (0) target = $region37
    $region36: #{tpu_custom_call.1} parent=1 // pred_region
      %s68 = ssub.s32 1024, 1024
      %69 = vsyncadd [#allocation9], %s68
      %s70 = sshll.u32 [#allocation8], 4
      %s71 = int_to_ptr.vmem [resolvable:$true] %s70
      %76 = dma.hbm_to_vmem [thread:$0]  %s8, 1024, %s71, [#allocation9], 64, 64, 4
    $region37: #{tpu_custom_call.1} parent=1 // pred_fallthru
      _
    // Predicated region
    $region38: #{tpu_custom_call.1} parent=1 // pred_check
      _
    $region39: #{tpu_custom_call.1} parent=1 // pred_check_branch
      %78 = sbr.rel (0) target = $region41
    $region40: #{tpu_custom_call.1} parent=1 // pred_region
      _
    $region41: #{tpu_custom_call.1} parent=1 // pred_fallthru
      _
    // Predicated region
    $region42: #{tpu_custom_call.1} parent=1 // pred_check
      _
    $region43: #{tpu_custom_call.1} parent=1 // pred_check_branch
      %80 = sbr.rel (0) target = $region45
    $region44: #{tpu_custom_call.1} parent=1 // pred_region
      %81 = dma.done [#allocation3], 1024
    $region45: #{tpu_custom_call.1} parent=1 // pred_fallthru
      _
    // Predicated region
    $region46: #{tpu_custom_call.1} parent=1 // pred_check
      _
    $region47: #{tpu_custom_call.1} parent=1 // pred_check_branch
      %83 = sbr.rel (0) target = $region49
    $region48: #{tpu_custom_call.1} parent=1 // pred_region
      %84 = dma.done [#allocation6], 1024
    $region49: #{tpu_custom_call.1} parent=1 // pred_fallthru
      _
    // Predicated region
    $region50: #{tpu_custom_call.1} parent=1 // pred_check
      _
    $region51: #{tpu_custom_call.1} parent=1 // pred_check_branch
      %86 = sbr.rel (0) target = $region53
    $region52: #{tpu_custom_call.1} parent=1 // pred_region
      %87 = dma.done [#allocation6], 1024
    $region53: #{tpu_custom_call.1} parent=1 // pred_fallthru
      _
    // Predicated region
    $region54: #{tpu_custom_call.1} parent=1 // pred_check
      _
    $region55: #{tpu_custom_call.1} parent=1 // pred_check_branch
      %89 = sbr.rel (0) target = $region57
    $region56: #{tpu_custom_call.1} parent=1 // pred_region
      %90 = dma.done [#allocation9], 1024
    $region57: #{tpu_custom_call.1} parent=1 // pred_fallthru
      _
    %v92 = vld [vmem:[%s0] sm:$0xf]
    %v93 = vld [vmem:[%s1] sm:$0xff]
    %v94 = vld [vmem:[#allocation2] sm:$0xf]
    %v95 = vld [vmem:[#allocation2 + $0x4] sm:$0xf]
    %v96 = vld [vmem:[#allocation2 + $0x8] sm:$0xf]
    %v97 = vld [vmem:[#allocation2 + $0xc] sm:$0xf]
    %v98 = vld [vmem:[#allocation2 + $0x10] sm:$0xf]
    %v99 = vld [vmem:[#allocation2 + $0x14] sm:$0xf]
    %v100 = vld [vmem:[#allocation2 + $0x18] sm:$0xf]
    %v101 = vld [vmem:[#allocation2 + $0x1c] sm:$0xf]
    %v102 = vld [vmem:[#allocation2 + $0x20] sm:$0xf]
    %v103 = vld [vmem:[#allocation2 + $0x24] sm:$0xf]
    %v104 = vld [vmem:[#allocation2 + $0x28] sm:$0xf]
    %v105 = vld [vmem:[#allocation2 + $0x2c] sm:$0xf]
    %v106 = vld [vmem:[#allocation2 + $0x30] sm:$0xf]
    %v107 = vld [vmem:[#allocation2 + $0x34] sm:$0xf]
    %v108 = vld [vmem:[#allocation2 + $0x38] sm:$0xf]
    %v109 = vld [vmem:[#allocation2 + $0x3c] sm:$0xf]
    %v110 = vld [vmem:[%s3] sm:$0x1]
    %v112 = vlaneseq
    %v113 = vshrl.u32 %v112, 7
    %v114 = vsub.s32 0, %v113
    %v115 = vrot.slane %v110, %v114
    %v133 = vunpack.c.l.b16 %v94
    %v134 = vunpack.c.l.b16 %v95
    %v135 = vunpack.c.l.b16 %v96
    %v136 = vunpack.c.l.b16 %v97
    %v137 = vunpack.c.l.b16 %v98
    %v138 = vunpack.c.l.b16 %v99
    %v139 = vunpack.c.l.b16 %v100
    %v140 = vunpack.c.l.b16 %v101
    %v141 = vunpack.c.l.b16 %v102
    %v142 = vunpack.c.l.b16 %v103
    %v143 = vunpack.c.l.b16 %v104
    %v144 = vunpack.c.l.b16 %v105
    %v145 = vunpack.c.l.b16 %v106
    %v146 = vunpack.c.l.b16 %v107
    %v147 = vunpack.c.l.b16 %v108
    %v148 = vunpack.c.l.b16 %v109
    %v149 = vpack.c.b16 %v134, %v133
    %v150 = vpack.c.b16 %v136, %v135
    %v151 = vpack.c.b16 %v138, %v137
    %v152 = vpack.c.b16 %v140, %v139
    %v153 = vpack.c.b16 %v142, %v141
    %v154 = vpack.c.b16 %v144, %v143
    %v155 = vpack.c.b16 %v146, %v145
    %v156 = vpack.c.b16 %v148, %v147
    %165 = vmatprep.subr.bf16.mxu0 0
    %166 = vmatpush1.bf16.msra.mxu0 %v156
    %167 = vmatprep.subr.bf16.mxu0 0
    %168 = vmatpush1.bf16.msra.mxu0 %v155
    %169 = vmatprep.subr.bf16.mxu0 0
    %170 = vmatpush1.bf16.msra.mxu0 %v154
    %171 = vmatprep.subr.bf16.mxu0 0
    %172 = vmatpush1.bf16.msra.mxu0 %v153
    %173 = vmatprep.subr.bf16.mxu0 0
    %174 = vmatpush1.bf16.msra.mxu0 %v152
    %175 = vmatprep.subr.bf16.mxu0 0
    %176 = vmatpush1.bf16.msra.mxu0 %v151
    %177 = vmatprep.subr.bf16.mxu0 0
    %178 = vmatpush1.bf16.msra.mxu0 %v150
    %179 = vmatprep.subr.bf16.mxu0 0
    %180 = vmatpush1.bf16.msra.mxu0 %v149
    %181 = vmatprep.subr.bf16.mxu0 0
    %182 = vmatpush2.bf16.msra.mxu0 0
    %183 = vmatprep.subr.bf16.mxu0 0
    %184 = vmatpush2.bf16.msra.mxu0 0
    %185 = vmatprep.subr.bf16.mxu0 0
    %186 = vmatpush2.bf16.msra.mxu0 0
    %187 = vmatprep.subr.bf16.mxu0 0
    %188 = vmatpush2.bf16.msra.mxu0 0
    %189 = vmatprep.subr.bf16.mxu0 0
    %190 = vmatpush2.bf16.msra.mxu0 0
    %191 = vmatprep.subr.bf16.mxu0 0
    %192 = vmatpush2.bf16.msra.mxu0 0
    %193 = vmatprep.subr.bf16.mxu0 0
    %194 = vmatpush2.bf16.msra.mxu0 0
    %195 = vmatprep.subr.bf16.mxu0 0
    %196 = vmatpush2.bf16.msra.mxu0 0
    %197 = vmatprep.mubr.bf16.mxu0 0
    %198 = vmatmul.mubr.bf16.gmra.mxu0 %v92
    %v199 = vpop.f32.mrf.mxu0
    %v200 = vadd.f32 %v115, %v199
    %v201 = vpop.f32.mrf.mxu0
    %v202 = vpop.f32.mrf.mxu0
    %v203 = vpop.f32.mrf.mxu0
    %204 = vdwg.mxu0
    %v205 = vmax.f32 %v200, 0.0
    %v206 = vpack.c.bf16 %v205, %v205
    %v207 = vld [vmem:[#allocation5] sm:$0xf]
    %v208 = vld [vmem:[#allocation5 + $0x4] sm:$0xf]
    %v209 = vld [vmem:[#allocation5 + $0x8] sm:$0xf]
    %v210 = vld [vmem:[#allocation5 + $0xc] sm:$0xf]
    %v211 = vld [vmem:[#allocation5 + $0x10] sm:$0xf]
    %v212 = vld [vmem:[#allocation5 + $0x14] sm:$0xf]
    %v213 = vld [vmem:[#allocation5 + $0x18] sm:$0xf]
    %v214 = vld [vmem:[#allocation5 + $0x1c] sm:$0xf]
    %v215 = vld [vmem:[#allocation5 + $0x20] sm:$0xf]
    %v216 = vld [vmem:[#allocation5 + $0x24] sm:$0xf]
    %v217 = vld [vmem:[#allocation5 + $0x28] sm:$0xf]
    %v218 = vld [vmem:[#allocation5 + $0x2c] sm:$0xf]
    %v219 = vld [vmem:[#allocation5 + $0x30] sm:$0xf]
    %v220 = vld [vmem:[#allocation5 + $0x34] sm:$0xf]
    %v221 = vld [vmem:[#allocation5 + $0x38] sm:$0xf]
    %v222 = vld [vmem:[#allocation5 + $0x3c] sm:$0xf]
    %v223 = vld [vmem:[%s5] sm:$0x1]
    %v225 = vlaneseq
    %v226 = vshrl.u32 %v225, 7
    %v227 = vsub.s32 0, %v226
    %v228 = vrot.slane %v223, %v227
    %v246 = vunpack.c.l.b16 %v207
    %v247 = vunpack.c.l.b16 %v208
    %v248 = vunpack.c.l.b16 %v209
    %v249 = vunpack.c.l.b16 %v210
    %v250 = vunpack.c.l.b16 %v211
    %v251 = vunpack.c.l.b16 %v212
    %v252 = vunpack.c.l.b16 %v213
    %v253 = vunpack.c.l.b16 %v214
    %v254 = vunpack.c.l.b16 %v215
    %v255 = vunpack.c.l.b16 %v216
    %v256 = vunpack.c.l.b16 %v217
    %v257 = vunpack.c.l.b16 %v218
    %v258 = vunpack.c.l.b16 %v219
    %v259 = vunpack.c.l.b16 %v220
    %v260 = vunpack.c.l.b16 %v221
    %v261 = vunpack.c.l.b16 %v222
    %v262 = vpack.c.b16 %v247, %v246
    %v263 = vpack.c.b16 %v249, %v248
    %v264 = vpack.c.b16 %v251, %v250
    %v265 = vpack.c.b16 %v253, %v252
    %v266 = vpack.c.b16 %v255, %v254
    %v267 = vpack.c.b16 %v257, %v256
    %v268 = vpack.c.b16 %v259, %v258
    %v269 = vpack.c.b16 %v261, %v260
    %278 = vmatprep.subr.bf16.mxu0 0
    %279 = vmatpush1.bf16.msra.mxu0 %v269
    %280 = vmatprep.subr.bf16.mxu0 0
    %281 = vmatpush1.bf16.msra.mxu0 %v268
    %282 = vmatprep.subr.bf16.mxu0 0
    %283 = vmatpush1.bf16.msra.mxu0 %v267
    %284 = vmatprep.subr.bf16.mxu0 0
    %285 = vmatpush1.bf16.msra.mxu0 %v266
    %286 = vmatprep.subr.bf16.mxu0 0
    %287 = vmatpush1.bf16.msra.mxu0 %v265
    %288 = vmatprep.subr.bf16.mxu0 0
    %289 = vmatpush1.bf16.msra.mxu0 %v264
    %290 = vmatprep.subr.bf16.mxu0 0
    %291 = vmatpush1.bf16.msra.mxu0 %v263
    %292 = vmatprep.subr.bf16.mxu0 0
    %293 = vmatpush1.bf16.msra.mxu0 %v262
    %294 = vmatprep.subr.bf16.mxu0 0
    %295 = vmatpush2.bf16.msra.mxu0 0
    %296 = vmatprep.subr.bf16.mxu0 0
    %297 = vmatpush2.bf16.msra.mxu0 0
    %298 = vmatprep.subr.bf16.mxu0 0
    %299 = vmatpush2.bf16.msra.mxu0 0
    %300 = vmatprep.subr.bf16.mxu0 0
    %301 = vmatpush2.bf16.msra.mxu0 0
    %302 = vmatprep.subr.bf16.mxu0 0
    %303 = vmatpush2.bf16.msra.mxu0 0
    %304 = vmatprep.subr.bf16.mxu0 0
    %305 = vmatpush2.bf16.msra.mxu0 0
    %306 = vmatprep.subr.bf16.mxu0 0
    %307 = vmatpush2.bf16.msra.mxu0 0
    %308 = vmatprep.subr.bf16.mxu0 0
    %309 = vmatpush2.bf16.msra.mxu0 0
    %310 = vmatprep.mubr.bf16.mxu0 0
    %311 = vmatmul.mubr.bf16.gmra.mxu0 %v206
    %v312 = vpop.f32.mrf.mxu0
    %v313 = vadd.f32 %v228, %v312
    %v314 = vpop.f32.mrf.mxu0
    %v315 = vpop.f32.mrf.mxu0
    %v316 = vpop.f32.mrf.mxu0
    %317 = vdwg.mxu0
    %v318 = vld [vmem:[#allocation7] sm:$0xf]
    %v319 = vld [vmem:[#allocation7 + $0x4] sm:$0xf]
    %v320 = vld [vmem:[#allocation7 + $0x8] sm:$0xf]
    %v321 = vld [vmem:[#allocation7 + $0xc] sm:$0xf]
    %v322 = vld [vmem:[#allocation7 + $0x10] sm:$0xf]
    %v323 = vld [vmem:[#allocation7 + $0x14] sm:$0xf]
    %v324 = vld [vmem:[#allocation7 + $0x18] sm:$0xf]
    %v325 = vld [vmem:[#allocation7 + $0x1c] sm:$0xf]
    %v326 = vld [vmem:[#allocation7 + $0x20] sm:$0xf]
    %v327 = vld [vmem:[#allocation7 + $0x24] sm:$0xf]
    %v328 = vld [vmem:[#allocation7 + $0x28] sm:$0xf]
    %v329 = vld [vmem:[#allocation7 + $0x2c] sm:$0xf]
    %v330 = vld [vmem:[#allocation7 + $0x30] sm:$0xf]
    %v331 = vld [vmem:[#allocation7 + $0x34] sm:$0xf]
    %v332 = vld [vmem:[#allocation7 + $0x38] sm:$0xf]
    %v333 = vld [vmem:[#allocation7 + $0x3c] sm:$0xf]
    %v334 = vld [vmem:[%s7] sm:$0x1]
    %v336 = vlaneseq
    %v337 = vshrl.u32 %v336, 7
    %v338 = vsub.s32 0, %v337
    %v339 = vrot.slane %v334, %v338
    %v357 = vunpack.c.l.b16 %v318
    %v358 = vunpack.c.l.b16 %v319
    %v359 = vunpack.c.l.b16 %v320
    %v360 = vunpack.c.l.b16 %v321
    %v361 = vunpack.c.l.b16 %v322
    %v362 = vunpack.c.l.b16 %v323
    %v363 = vunpack.c.l.b16 %v324
    %v364 = vunpack.c.l.b16 %v325
    %v365 = vunpack.c.l.b16 %v326
    %v366 = vunpack.c.l.b16 %v327
    %v367 = vunpack.c.l.b16 %v328
    %v368 = vunpack.c.l.b16 %v329
    %v369 = vunpack.c.l.b16 %v330
    %v370 = vunpack.c.l.b16 %v331
    %v371 = vunpack.c.l.b16 %v332
    %v372 = vunpack.c.l.b16 %v333
    %v373 = vpack.c.b16 %v358, %v357
    %v374 = vpack.c.b16 %v360, %v359
    %v375 = vpack.c.b16 %v362, %v361
    %v376 = vpack.c.b16 %v364, %v363
    %v377 = vpack.c.b16 %v366, %v365
    %v378 = vpack.c.b16 %v368, %v367
    %v379 = vpack.c.b16 %v370, %v369
    %v380 = vpack.c.b16 %v372, %v371
    %389 = vmatprep.subr.bf16.mxu0 0
    %390 = vmatpush1.bf16.msra.mxu0 %v380
    %391 = vmatprep.subr.bf16.mxu0 0
    %392 = vmatpush1.bf16.msra.mxu0 %v379
    %393 = vmatprep.subr.bf16.mxu0 0
    %394 = vmatpush1.bf16.msra.mxu0 %v378
    %395 = vmatprep.subr.bf16.mxu0 0
    %396 = vmatpush1.bf16.msra.mxu0 %v377
    %397 = vmatprep.subr.bf16.mxu0 0
    %398 = vmatpush1.bf16.msra.mxu0 %v376
    %399 = vmatprep.subr.bf16.mxu0 0
    %400 = vmatpush1.bf16.msra.mxu0 %v375
    %401 = vmatprep.subr.bf16.mxu0 0
    %402 = vmatpush1.bf16.msra.mxu0 %v374
    %403 = vmatprep.subr.bf16.mxu0 0
    %404 = vmatpush1.bf16.msra.mxu0 %v373
    %405 = vmatprep.subr.bf16.mxu0 0
    %406 = vmatpush2.bf16.msra.mxu0 0
    %407 = vmatprep.subr.bf16.mxu0 0
    %408 = vmatpush2.bf16.msra.mxu0 0
    %409 = vmatprep.subr.bf16.mxu0 0
    %410 = vmatpush2.bf16.msra.mxu0 0
    %411 = vmatprep.subr.bf16.mxu0 0
    %412 = vmatpush2.bf16.msra.mxu0 0
    %413 = vmatprep.subr.bf16.mxu0 0
    %414 = vmatpush2.bf16.msra.mxu0 0
    %415 = vmatprep.subr.bf16.mxu0 0
    %416 = vmatpush2.bf16.msra.mxu0 0
    %417 = vmatprep.subr.bf16.mxu0 0
    %418 = vmatpush2.bf16.msra.mxu0 0
    %419 = vmatprep.subr.bf16.mxu0 0
    %420 = vmatpush2.bf16.msra.mxu0 0
    %421 = vmatprep.mubr.bf16.mxu0 0
    %422 = vmatmul.mubr.bf16.gmra.mxu0 %v92
    %v423 = vpop.f32.mrf.mxu0
    %v424 = vadd.f32 %v339, %v423
    %v425 = vpop.f32.mrf.mxu0
    %v426 = vpop.f32.mrf.mxu0
    %v427 = vpop.f32.mrf.mxu0
    %428 = vdwg.mxu0
    %v429 = vmax.f32 %v424, 0.0
    %v430 = vpack.c.bf16 %v429, %v429
    %v431 = vld [vmem:[#allocation8] sm:$0xf]
    %v432 = vld [vmem:[#allocation8 + $0x4] sm:$0xf]
    %v433 = vld [vmem:[#allocation8 + $0x8] sm:$0xf]
    %v434 = vld [vmem:[#allocation8 + $0xc] sm:$0xf]
    %v435 = vld [vmem:[#allocation8 + $0x10] sm:$0xf]
    %v436 = vld [vmem:[#allocation8 + $0x14] sm:$0xf]
    %v437 = vld [vmem:[#allocation8 + $0x18] sm:$0xf]
    %v438 = vld [vmem:[#allocation8 + $0x1c] sm:$0xf]
    %v439 = vld [vmem:[#allocation8 + $0x20] sm:$0xf]
    %v440 = vld [vmem:[#allocation8 + $0x24] sm:$0xf]
    %v441 = vld [vmem:[#allocation8 + $0x28] sm:$0xf]
    %v442 = vld [vmem:[#allocation8 + $0x2c] sm:$0xf]
    %v443 = vld [vmem:[#allocation8 + $0x30] sm:$0xf]
    %v444 = vld [vmem:[#allocation8 + $0x34] sm:$0xf]
    %v445 = vld [vmem:[#allocation8 + $0x38] sm:$0xf]
    %v446 = vld [vmem:[#allocation8 + $0x3c] sm:$0xf]
    %v447 = vld [vmem:[%s9] sm:$0x1]
    %v449 = vlaneseq
    %v450 = vshrl.u32 %v449, 7
    %v451 = vsub.s32 0, %v450
    %v452 = vrot.slane %v447, %v451
    %v470 = vunpack.c.l.b16 %v431
    %v471 = vunpack.c.l.b16 %v432
    %v472 = vunpack.c.l.b16 %v433
    %v473 = vunpack.c.l.b16 %v434
    %v474 = vunpack.c.l.b16 %v435
    %v475 = vunpack.c.l.b16 %v436
    %v476 = vunpack.c.l.b16 %v437
    %v477 = vunpack.c.l.b16 %v438
    %v478 = vunpack.c.l.b16 %v439
    %v479 = vunpack.c.l.b16 %v440
    %v480 = vunpack.c.l.b16 %v441
    %v481 = vunpack.c.l.b16 %v442
    %v482 = vunpack.c.l.b16 %v443
    %v483 = vunpack.c.l.b16 %v444
    %v484 = vunpack.c.l.b16 %v445
    %v485 = vunpack.c.l.b16 %v446
    %v486 = vpack.c.b16 %v471, %v470
    %v487 = vpack.c.b16 %v473, %v472
    %v488 = vpack.c.b16 %v475, %v474
    %v489 = vpack.c.b16 %v477, %v476
    %v490 = vpack.c.b16 %v479, %v478
    %v491 = vpack.c.b16 %v481, %v480
    %v492 = vpack.c.b16 %v483, %v482
    %v493 = vpack.c.b16 %v485, %v484
    %502 = vmatprep.subr.bf16.mxu0 0
    %503 = vmatpush1.bf16.msra.mxu0 %v493
    %504 = vmatprep.subr.bf16.mxu0 0
    %505 = vmatpush1.bf16.msra.mxu0 %v492
    %506 = vmatprep.subr.bf16.mxu0 0
    %507 = vmatpush1.bf16.msra.mxu0 %v491
    %508 = vmatprep.subr.bf16.mxu0 0
    %509 = vmatpush1.bf16.msra.mxu0 %v490
    %510 = vmatprep.subr.bf16.mxu0 0
    %511 = vmatpush1.bf16.msra.mxu0 %v489
    %512 = vmatprep.subr.bf16.mxu0 0
    %513 = vmatpush1.bf16.msra.mxu0 %v488
    %514 = vmatprep.subr.bf16.mxu0 0
    %515 = vmatpush1.bf16.msra.mxu0 %v487
    %516 = vmatprep.subr.bf16.mxu0 0
    %517 = vmatpush1.bf16.msra.mxu0 %v486
    %518 = vmatprep.subr.bf16.mxu0 0
    %519 = vmatpush2.bf16.msra.mxu0 0
    %520 = vmatprep.subr.bf16.mxu0 0
    %521 = vmatpush2.bf16.msra.mxu0 0
    %522 = vmatprep.subr.bf16.mxu0 0
    %523 = vmatpush2.bf16.msra.mxu0 0
    %524 = vmatprep.subr.bf16.mxu0 0
    %525 = vmatpush2.bf16.msra.mxu0 0
    %526 = vmatprep.subr.bf16.mxu0 0
    %527 = vmatpush2.bf16.msra.mxu0 0
    %528 = vmatprep.subr.bf16.mxu0 0
    %529 = vmatpush2.bf16.msra.mxu0 0
    %530 = vmatprep.subr.bf16.mxu0 0
    %531 = vmatpush2.bf16.msra.mxu0 0
    %532 = vmatprep.subr.bf16.mxu0 0
    %533 = vmatpush2.bf16.msra.mxu0 0
    %534 = vmatprep.mubr.bf16.mxu0 0
    %535 = vmatmul.mubr.bf16.gmra.mxu0 %v430
    %v536 = vpop.f32.mrf.mxu0
    %v537 = vadd.f32 %v452, %v536
    %v538 = vpop.f32.mrf.mxu0
    %v539 = vpop.f32.mrf.mxu0
    %v540 = vpop.f32.mrf.mxu0
    %541 = vdwg.mxu0
    %v542 = vmax.f32 %v537, 0.0
    %vm543 = vcmp.ne.f32.partialorder %v537, %v537
    %v544 = vadd.f32 %v537, 0.0
    %v545 = vand.u32 2147483647, %v537
    %v546 = vsub.f32 0.0, %v545
    %v547 = vmul.f32 %v546, 1.442695
    %v548 = vpow.pop %v547
    %v549 = vadd.f32 %v548, 1.0
    %v550 = vlog2.pop %v549
    %v551 = vmul.f32 %v550, 0.6931472
    %v552 = vmul.f32 -0.5, %v548
    %v553 = vadd.f32 %v552, 1.0
    %v554 = vmul.f32 %v553, %v548
    %v555 = vand.u32 2147483647, %v548
    %vm556 = vcmp.lt.f32.partialorder %v555, 0.0004427343
    %v557 = vsel %vm556, %v554, %v551
    %v558 = vadd.f32 %v542, %v557
    %v559 = vsel %vm543, %v544, %v558
    %v560 = vmax.f32 %v559, 0.00034526698
    %vm561 = vcmp.gt.f32.partialorder %v93, 0.0
    %v562 = vsel %vm561, 1, 0
    %v563 = vcvt.s32.f32 %v562
    %v564 = vmul.f32 %v537, %v563
    %v565 = vsub.f32 %v542, %v564
    %v566 = vadd.f32 %v565, %v557
    %v567 = vmul.f32 %v563, %v93
    %v568 = vsub.f32 1.0, %v563
    %v569 = vadd.f32 %v567, %v568
    %v570 = vsub.f32 0.0, %v563
    %v571 = vlog2.pop %v569
    %v572 = vmul.f32 %v571, 0.6931472
    %v573 = vsub.f32 0.0, %v572
    %v574 = vlog2.pop %v560
    %v575 = vmul.f32 %v574, 0.6931472
    %577 = vrot.lane.b32.xlu0 %v575, 126
    %v578 = vpop.permute.xlu0 %577
    %v580 = vsub.f32 %v573, %v578
    %v581 = vsub.f32 %v580, 0.9189385
    %583 = vrot.lane.b32.xlu0 %v537, 127
    %v584 = vpop.permute.xlu0 %583
    %v586 = vsub.f32 %v572, %v584
    %v587 = vmul.f32 %v586, %v586
    %v588 = vmul.f32 %v560, %v560
    %v589 = vmul.f32 %v588, 2.0
    %591 = vrot.lane.b32.xlu0 %v589, 126
    %v592 = vpop.permute.xlu0 %591
    %v594 = vrcp.pop %v592
    %v595 = vmul.f32 %v587, %v594
    %v596 = vsub.f32 %v581, %v595
    %v597 = vmul.f32 %v570, %v596
    %v598 = vadd.f32 %v566, %v597
    %v599 = vxor.u32 %v313, 2147483648
    %v600 = vmul.f32 %v599, 1.442695
    %v601 = vpow.pop %v600
    %v602 = vadd.f32 %v601, 1.0
    %v603 = vrcp.pop %v602
    %v604 = vmul.f32 1.0, %v603
    %v605 = vmul.f32 %v313, %v313
    %v606 = vmul.f32 %v605, 0.5
    %608 = vrot.lane.b32.xlu0 %v606, 127
    %v609 = vpop.permute.xlu0 %608
    %v611 = vadd.f32 %v313, %v609
    %v612 = vmul.f32 %v611, 1.442695
    %v613 = vpow.pop %v612
    %615 = vrot.lane.b32.xlu0 %v613, 127
    %v616 = vpop.permute.xlu0 %615
    %v618 = vmul.f32 %v604, %v616
    %v619 = vxor.u32 %v537, 2147483648
    %v620 = vmul.f32 %v619, 1.442695
    %v621 = vpow.pop %v620
    %v622 = vadd.f32 %v621, 1.0
    %v623 = vrcp.pop %v622
    %v624 = vmul.f32 1.0, %v623
    %v625 = vsub.f32 %v604, %v624
    %v626 = vadd.f32 %v604, 1e-10
    %v627 = vlog2.pop %v626
    %v628 = vmul.f32 %v627, 0.6931472
    %v629 = vadd.f32 %v624, 1e-10
    %v630 = vlog2.pop %v629
    %v631 = vmul.f32 %v630, 0.6931472
    %v632 = vsub.f32 %v628, %v631
    %v633 = vmul.f32 %v625, %v632
    %v634 = vsub.f32 1.0, %v604
    %v635 = vadd.f32 %v618, %v634
    %v636 = vsub.f32 0.0, %v604
    %v637 = vlog2.pop %v635
    %v638 = vmul.f32 %v637, 0.6931472
    %v639 = vsub.f32 0.0, %v638
    %v640 = vsub.f32 %v639, %v578
    %v641 = vsub.f32 %v640, 0.9189385
    %v642 = vsub.f32 %v638, %v584
    %v643 = vmul.f32 %v642, %v642
    %v644 = vmul.f32 %v643, %v594
    %v645 = vsub.f32 %v641, %v644
    %v646 = vmul.f32 %v636, %v645
    %v647 = vadd.f32 %v633, %v646
    %v648 = vmul.f32 %v559, %v559
    %v649 = vmul.f32 %v648, 0.5
    %651 = vrot.lane.b32.xlu0 %v649, 127
    %v652 = vpop.permute.xlu0 %651
    %v654 = vadd.f32 %v537, %v652
    %v655 = vmul.f32 %v654, 1.442695
    %v656 = vpow.pop %v655
    %658 = vrot.lane.b32.xlu0 %v656, 127
    %v659 = vpop.permute.xlu0 %658
    %v661 = vmul.f32 %v624, %v659
    %v662 = vlaneseq
    %v663 = vand.u32 %v662, 127
    %vm664 = vcmp.lt.s32.totalorder %v663, 3
    %v665 = vsel %vm664, %v537, 0.0
    %vm666 = vcmp.eq.s32.totalorder %v663, 3
    %668 = vset.pattern.permute.xlu0 0
    %669 = vperm.xlu0 %668, %v624
    %v670 = vpop.permute.xlu0 %669
    %v672 = vsel %vm666, %v670, %v665
    %vm673 = vcmp.eq.s32.totalorder %v663, 4
    %675 = vset.pattern.permute.xlu0 0
    %676 = vperm.xlu0 %675, %v661
    %v677 = vpop.permute.xlu0 %676
    %v679 = vsel %vm673, %v677, %v672
    %vm680 = vcmp.eq.s32.totalorder %v663, 5
    %682 = vset.pattern.permute.xlu0 0
    %683 = vperm.xlu0 %682, %v598
    %v684 = vpop.permute.xlu0 %683
    %v686 = vsel %vm680, %v684, %v679
    %vm687 = vcmp.eq.s32.totalorder %v663, 6
    %689 = vset.pattern.permute.xlu0 0
    %690 = vperm.xlu0 %689, %v647
    %v691 = vpop.permute.xlu0 %690
    %v693 = vsel %vm687, %v691, %v686
    %694 = vst [vmem:[#allocation10] sm:$0xff] %v693
    // Predicated region
    $region58: #{tpu_custom_call.1} parent=1 // pred_check
      _
    $region59: #{tpu_custom_call.1} parent=1 // pred_check_branch
      %696 = sbr.rel (0) target = $region61
    $region60: #{tpu_custom_call.1} parent=1 // pred_region
      %s698 = ssub.s32 128, 128
      %699 = vsyncadd [#allocation4], %s698
      %s701 = sshll.u32 [#allocation10], 4
      %s702 = int_to_ptr.vmem [resolvable:$true] %s701
      %704 = dma.vmem_to_hbm [thread:$0]  %s702, 128, %s10, [#allocation4]
    $region61: #{tpu_custom_call.1} parent=1 // pred_fallthru
      _
    // Predicated region
    $region62: #{tpu_custom_call.1} parent=1 // pred_check
      _
    $region63: #{tpu_custom_call.1} parent=1 // pred_check_branch
      %706 = sbr.rel (0) target = $region65
    $region64: #{tpu_custom_call.1} parent=1 // pred_region
      %707 = dma.done [#allocation4], 128
    $region65: #{tpu_custom_call.1} parent=1 // pred_fallthru
      _
    %708 = vsyncpa [#allocation3], 1
    %709 = vsyncpa [#allocation6], 1
    %710 = vsyncpa [#allocation9], 1
    %711 = vsyncpa [#allocation4], 1

</llo_original>
